<compile_context>
chip_gen: v5e
topology: v5e:2x2
jax: 0.10.0
libtpu: 0.0.40
codegen_flags: <defaults>
</compile_context>

<pallas_src>
import functools

import jax
import jax.numpy as jnp
from jax.experimental import pallas as pl
from jax.experimental.pallas import tpu as pltpu


def _round_up(x, m):
    return ((x + m - 1) // m) * m


# ---------------------------------------------------------------------------
# Kernel
# ---------------------------------------------------------------------------
def _critic_kernel(act_ref, w_ref, out_ref, *, seq_len, t_pad, s_pad, h2):
    f32 = jnp.float32
    S = s_pad
    G = 4 * h2

    # -------- per-call pack: activations + initial state --------------------
    x = act_ref[0:t_pad, :]                          # (T_pad, S)  [laser|obs|acts|0]
    h = act_ref[t_pad:t_pad + 1, 0:h2]               # (1, h2)  register-resident
    c = act_ref[t_pad + 1:t_pad + 2, 0:h2]

    # -------- cached weight pack (all blocks 8-row aligned) ------------------
    wpre = w_ref[0:S, 0:S]                           # (S, S)   rows 0:las used
    w1a = w_ref[S:2 * S, 0:S]                        # (S, S)   rows 0:PRE used
    w1b = w_ref[2 * S:3 * S, 0:S]                    # (S, S)   rows las:las+obs used
    vec = w_ref[3 * S:3 * S + 8, 0:S]                # rows: bpre, b1, wfc3, bfc3
    bpre = vec[0:1, :]
    b1 = vec[1:2, :]
    wfc3 = vec[2:3, 0:h2]                            # (1, h2)
    bfc3 = vec[3:4, 0:1]                             # (1, 1)

    r0 = 3 * S + 8
    wih_fc = w_ref[r0:r0 + S, 0:G]                   # (S, G)  fc1 rows used
    wih_x = w_ref[r0 + S:r0 + 2 * S, 0:G]            # (S, G)  act rows used
    bih = w_ref[r0 + 2 * S:r0 + 2 * S + 1, 0:G]      # (1, G)  = b_ih + b_hh (scaled)
    r1 = r0 + 2 * S + 8
    whh = w_ref[r1:r1 + h2, 0:G]                     # (h2, G)

    # -------- PreFC + ReLU ---------------------------------------------------
    pre = jnp.maximum(jnp.dot(x, wpre, preferred_element_type=f32) + bpre, 0.0)
    # -------- FC1 + ReLU over cat([pre, obs]) (weights pre-split, no concat) -
    fc1 = jnp.maximum(jnp.dot(pre, w1a, preferred_element_type=f32)
                      + jnp.dot(x, w1b, preferred_element_type=f32) + b1, 0.0)
    # -------- input->gate contributions for all timesteps (kept in vregs) ---
    # Gate order is [i, f, o, g]; the i/f/o columns are already scaled by 0.5.
    gx = (jnp.dot(fc1, wih_fc, preferred_element_type=f32)
          + jnp.dot(x, wih_x, preferred_element_type=f32) + bih)    # (T_pad, G)

    # -------- recurrence: fully unrolled, h/c in vregs, 2 EUP launches/step --
    hs = []
    for t in range(seq_len):
        gates = gx[t:t + 1, :] + jnp.dot(h, whh, preferred_element_type=f32)
        tg = jnp.tanh(gates)                         # EUP launch #1 (4*h2 lanes)
        sig = 0.5 * tg[:, 0:3 * h2] + 0.5            # sigmoid via tanh: [ i | f | o ]
        i_g = sig[:, 0 * h2:1 * h2]
        f_g = sig[:, 1 * h2:2 * h2]
        o_g = sig[:, 2 * h2:3 * h2]
        g_g = tg[:, 3 * h2:4 * h2]
        c = f_g * c + i_g * g_g
        h = o_g * jnp.tanh(c)                        # EUP launch #2 (h2 lanes)
        hs.append(h)

    hseq = jnp.concatenate(hs, axis=0)               # (T, h2) stays in vregs
    # -------- FC3 on VPU/XLU: multiply + lane reduce -> (T, 1) ---------------
    out_ref[...] = jnp.sum(hseq * wfc3, axis=-1, keepdims=True) + bfc3


# ---------------------------------------------------------------------------
# One-time weight packing (hoisted out of the per-call path)
# ---------------------------------------------------------------------------
def pack_critic_params(params):
    f32 = jnp.float32
    PRE = params["wpre"].shape[0]                    # 10
    las_dim = params["wpre"].shape[1]
    HL = params["w1"].shape[0]                       # hidden_layer
    obs_dim = params["w1"].shape[1] - PRE
    h2 = params["whh"].shape[1]                      # second_hidden_layer
    act_dim = params["wih"].shape[1] - HL
    in_dim = las_dim + obs_dim + act_dim
    G = 4 * h2

    # unified padded width for the activation path
    S = _round_up(max(in_dim, PRE, HL, h2), 8)
    W = max(S, G)                                    # single lane width for weight pack

    def z(*shape):
        return jnp.zeros(shape, f32)

    # Gate reorder [i, f, g, o] -> [i, f, o, g]; pre-scale i/f/o by 0.5 so the
    # in-kernel sigmoid becomes 0.5*tanh(gate)+0.5 (exact identity).
    def reorder_scale(w):
        return jnp.concatenate(
            [0.5 * w[0:h2], 0.5 * w[h2:2 * h2], 0.5 * w[3 * h2:4 * h2],
             w[2 * h2:3 * h2]], axis=0)

    wih_r = reorder_scale(params["wih"].astype(f32))          # (G, HL+act)
    whh_r = reorder_scale(params["whh"].astype(f32))          # (G, h2)
    b_r = reorder_scale((params["bih"] + params["bhh"]).astype(f32))   # (G,)

    wpre_blk = z(S, W).at[:las_dim, :PRE].set(params["wpre"].T.astype(f32))
    w1a_blk = z(S, W).at[:PRE, :HL].set(params["w1"][:, :PRE].T.astype(f32))
    w1b_blk = z(S, W).at[las_dim:las_dim + obs_dim, :HL].set(
        params["w1"][:, PRE:].T.astype(f32))
    vec_blk = z(8, W)
    vec_blk = vec_blk.at[0, :PRE].set(params["bpre"].astype(f32))
    vec_blk = vec_blk.at[1, :HL].set(params["b1"].astype(f32))
    vec_blk = vec_blk.at[2, :h2].set(params["wfc3"][0].astype(f32))
    vec_blk = vec_blk.at[3, 0].set(params["bfc3"][0].astype(f32))

    wih_fc_blk = z(S, W).at[:HL, :G].set(wih_r[:, :HL].T)
    wih_x_blk = z(S, W).at[las_dim + obs_dim:in_dim, :G].set(wih_r[:, HL:].T)
    bias_blk = z(8, W).at[0, :G].set(b_r)
    h2p = _round_up(h2, 8)
    whh_blk = z(h2p, W).at[:h2, :G].set(whh_r.T)

    w_pack = jnp.concatenate(
        [wpre_blk, w1a_blk, w1b_blk, vec_blk,
         wih_fc_blk, wih_x_blk, bias_blk, whh_blk], axis=0)

    return {"w_pack": w_pack, "S": S, "h2": h2, "in_dim": in_dim}


# ---------------------------------------------------------------------------
# Per-call forward (matches Critic.forward(obs, acts, laser, hidden))
# ---------------------------------------------------------------------------
def critic_forward(packed, obs, acts, laser, hidden):
    h0, c0 = hidden
    f32 = jnp.float32
    T = obs.shape[0]
    S = packed["S"]
    h2 = packed["h2"]
    in_dim = packed["in_dim"]
    T_pad = _round_up(T, 8)

    # Per-call work is just: concat activations, pad, append [h0; c0].
    x = jnp.concatenate([laser, obs, acts], axis=1).astype(f32)       # (T, in_dim)
    x = jnp.pad(x, ((0, T_pad - T), (0, S - in_dim)))                 # (T_pad, S)
    hc = jnp.concatenate([h0, c0], axis=0).astype(f32)                # (2, h2)
    hc = jnp.pad(hc, ((0, 8 - 2), (0, S - h2)))                       # (8, S)
    act_pack = jnp.concatenate([x, hc], axis=0)                       # (T_pad+8, S)

    kernel = functools.partial(_critic_kernel, seq_len=T, t_pad=T_pad,
                               s_pad=S, h2=h2)

    vmem = pl.BlockSpec(memory_space=pltpu.MemorySpace.VMEM)
    out = pl.pallas_call(
        kernel,
        out_shape=jax.ShapeDtypeStruct((T, 1), jnp.float32),
        in_specs=[vmem, vmem],
        out_specs=vmem,
    )(act_pack, packed["w_pack"])
    return out


# ---------------------------------------------------------------------------
# Pure-JAX reference (mirrors the PyTorch forward semantics)
# ---------------------------------------------------------------------------
def critic_reference(params, obs, acts, laser, hidden):
    h, c = hidden
    h2 = params["whh"].shape[1]
    pre = jax.nn.relu(laser @ params["wpre"].T + params["bpre"])
    comb = jnp.concatenate([pre, obs], axis=1)
    fc1 = jax.nn.relu(comb @ params["w1"].T + params["b1"])
    x_seq = jnp.concatenate([fc1, acts], axis=1)
    outs = []
    for t in range(x_seq.shape[0]):
        g = (x_seq[t:t + 1] @ params["wih"].T + params["bih"]
             + h @ params["whh"].T + params["bhh"])
        i = jax.nn.sigmoid(g[:, :h2])
        f = jax.nn.sigmoid(g[:, h2:2 * h2])
        gg = jnp.tanh(g[:, 2 * h2:3 * h2])
        o = jax.nn.sigmoid(g[:, 3 * h2:4 * h2])
        c = f * c + i * gg
        h = o * jnp.tanh(c)
        outs.append(h)
    hseq = jnp.concatenate(outs, axis=0)
    return hseq @ params["wfc3"].T + params["bfc3"]


if __name__ == "__main__":
    # Small deterministic setup consistent with the module's __init__.
    n_agent = 2
    dim_observation = 8
    dim_action = 2
    laser_cnt = 6
    hidden_layer = 32
    second_hidden_layer = 32
    T = 8                                  # rows (LSTM treats this as time)

    obs_dim = dim_observation * n_agent    # 16
    act_dim = dim_action * n_agent         # 4
    las_dim = laser_cnt * n_agent          # 12

    key = jax.random.PRNGKey(0)
    keys = jax.random.split(key, 16)

    def uni(k, shape, fan_in):
        bound = 1.0 / jnp.sqrt(jnp.float32(fan_in))
        return jax.random.uniform(k, shape, jnp.float32, -bound, bound)

    params = {
        "wpre": uni(keys[0], (10, las_dim), las_dim),
        "bpre": uni(keys[1], (10,), las_dim),
        "w1":   uni(keys[2], (hidden_layer, obs_dim + 10), obs_dim + 10),
        "b1":   uni(keys[3], (hidden_layer,), obs_dim + 10),
        "wih":  uni(keys[4], (4 * second_hidden_layer, hidden_layer + act_dim),
                    second_hidden_layer),
        "whh":  uni(keys[5], (4 * second_hidden_layer, second_hidden_layer),
                    second_hidden_layer),
        "bih":  uni(keys[6], (4 * second_hidden_layer,), second_hidden_layer),
        "bhh":  uni(keys[7], (4 * second_hidden_layer,), second_hidden_layer),
        "wfc3": uni(keys[8], (1, second_hidden_layer), second_hidden_layer),
        "bfc3": uni(keys[9], (1,), second_hidden_layer),
    }

    obs = jax.random.normal(keys[10], (T, obs_dim), jnp.float32)
    acts = jax.random.normal(keys[11], (T, act_dim), jnp.float32)
    laser = jax.random.normal(keys[12], (T, las_dim), jnp.float32)
    h0 = jax.random.normal(keys[13], (1, second_hidden_layer), jnp.float32)
    c0 = jax.random.normal(keys[14], (1, second_hidden_layer), jnp.float32)

    # Weight packing runs ONCE; only activation packing happens per call.
    packed = jax.tree_util.tree_map(
        lambda a: jax.block_until_ready(a) if isinstance(a, jax.Array) else a,
        pack_critic_params(params))

    out = critic_forward(packed, obs, acts, laser, (h0, c0))
    out = jax.block_until_ready(out)

    ref = critic_reference(params, obs, acts, laser, (h0, c0))
    assert out.shape == (T, 1), out.shape
    assert jnp.allclose(out, ref, atol=1e-4, rtol=1e-4), (out, ref)
    print("KERNEL_OK")
</pallas_src>

<mosaic_0001>
module attributes {stable_mosaic.version = 11 : i64} {
  func.func @_critic_kernel(%arg0: memref<16x32xf32, #tpu.memory_space<vmem>>, %arg1: memref<208x128xf32, #tpu.memory_space<vmem>>, %arg2: memref<8x1xf32, #tpu.memory_space<vmem>>) attributes {dimension_semantics = [], scalar_prefetch = 0 : i64, scratch_operands = 0 : i64, tpu.core_type = #tpu.core_type<tc>} {
    %c0 = arith.constant 0 : index
    %c0_0 = arith.constant 0 : index
    %0 = vector.load %arg0[%c0, %c0_0] : memref<16x32xf32, #tpu.memory_space<vmem>>, vector<8x32xf32>
    %c8 = arith.constant 8 : index
    %c0_1 = arith.constant 0 : index
    %1 = vector.load %arg0[%c8, %c0_1] : memref<16x32xf32, #tpu.memory_space<vmem>>, vector<1x32xf32>
    %c9 = arith.constant 9 : index
    %c0_2 = arith.constant 0 : index
    %2 = vector.load %arg0[%c9, %c0_2] : memref<16x32xf32, #tpu.memory_space<vmem>>, vector<1x32xf32>
    %c0_3 = arith.constant 0 : index
    %c0_4 = arith.constant 0 : index
    %3 = vector.load %arg1[%c0_3, %c0_4] : memref<208x128xf32, #tpu.memory_space<vmem>>, vector<32x32xf32>
    %c32 = arith.constant 32 : index
    %c0_5 = arith.constant 0 : index
    %4 = vector.load %arg1[%c32, %c0_5] : memref<208x128xf32, #tpu.memory_space<vmem>>, vector<32x32xf32>
    %c64 = arith.constant 64 : index
    %c0_6 = arith.constant 0 : index
    %5 = vector.load %arg1[%c64, %c0_6] : memref<208x128xf32, #tpu.memory_space<vmem>>, vector<32x32xf32>
    %c96 = arith.constant 96 : index
    %c0_7 = arith.constant 0 : index
    %6 = vector.load %arg1[%c96, %c0_7] : memref<208x128xf32, #tpu.memory_space<vmem>>, vector<8x32xf32>
    %7 = vector.extract_strided_slice %6 {offsets = [0, 0], sizes = [1, 32], strides = [1, 1]} : vector<8x32xf32> to vector<1x32xf32>
    %8 = vector.extract_strided_slice %6 {offsets = [1, 0], sizes = [1, 32], strides = [1, 1]} : vector<8x32xf32> to vector<1x32xf32>
    %9 = vector.extract_strided_slice %6 {offsets = [2, 0], sizes = [1, 32], strides = [1, 1]} : vector<8x32xf32> to vector<1x32xf32>
    %10 = vector.extract_strided_slice %6 {offsets = [3, 0], sizes = [1, 1], strides = [1, 1]} : vector<8x32xf32> to vector<1x1xf32>
    %c104 = arith.constant 104 : index
    %c0_8 = arith.constant 0 : index
    %11 = vector.load %arg1[%c104, %c0_8] : memref<208x128xf32, #tpu.memory_space<vmem>>, vector<32x128xf32>
    %c136 = arith.constant 136 : index
    %c0_9 = arith.constant 0 : index
    %12 = vector.load %arg1[%c136, %c0_9] : memref<208x128xf32, #tpu.memory_space<vmem>>, vector<32x128xf32>
    %c168 = arith.constant 168 : index
    %c0_10 = arith.constant 0 : index
    %13 = vector.load %arg1[%c168, %c0_10] : memref<208x128xf32, #tpu.memory_space<vmem>>, vector<1x128xf32>
    %c176 = arith.constant 176 : index
    %c0_11 = arith.constant 0 : index
    %14 = vector.load %arg1[%c176, %c0_11] : memref<208x128xf32, #tpu.memory_space<vmem>>, vector<32x128xf32>
    %cst = arith.constant dense<0.000000e+00> : vector<8x32xf32>
    %15 = tpu.matmul %0, %3, %cst {dimension_numbers = #tpu.dot_dimension_numbers<[1], [0], [0], [1], [0, 0, 1, 1], [], []>} : vector<8x32xf32>, vector<32x32xf32>, vector<8x32xf32> -> vector<8x32xf32>
    %16 = vector.broadcast %7 : vector<1x32xf32> to vector<8x32xf32>
    %17 = arith.addf %15, %16 : vector<8x32xf32>
    %cst_12 = arith.constant 0.000000e+00 : f32
    %18 = vector.broadcast %cst_12 : f32 to vector<8x32xf32>
    %19 = arith.maximumf %17, %18 : vector<8x32xf32>
    %cst_13 = arith.constant dense<0.000000e+00> : vector<8x32xf32>
    %20 = tpu.matmul %19, %4, %cst_13 {dimension_numbers = #tpu.dot_dimension_numbers<[1], [0], [0], [1], [0, 0, 1, 1], [], []>} : vector<8x32xf32>, vector<32x32xf32>, vector<8x32xf32> -> vector<8x32xf32>
    %cst_14 = arith.constant dense<0.000000e+00> : vector<8x32xf32>
    %21 = tpu.matmul %0, %5, %cst_14 {dimension_numbers = #tpu.dot_dimension_numbers<[1], [0], [0], [1], [0, 0, 1, 1], [], []>} : vector<8x32xf32>, vector<32x32xf32>, vector<8x32xf32> -> vector<8x32xf32>
    %22 = arith.addf %20, %21 : vector<8x32xf32>
    %23 = vector.broadcast %8 : vector<1x32xf32> to vector<8x32xf32>
    %24 = arith.addf %22, %23 : vector<8x32xf32>
    %cst_15 = arith.constant 0.000000e+00 : f32
    %25 = vector.broadcast %cst_15 : f32 to vector<8x32xf32>
    %26 = arith.maximumf %24, %25 : vector<8x32xf32>
    %cst_16 = arith.constant dense<0.000000e+00> : vector<8x128xf32>
    %27 = tpu.matmul %26, %11, %cst_16 {dimension_numbers = #tpu.dot_dimension_numbers<[1], [0], [0], [1], [0, 0, 1, 1], [], []>} : vector<8x32xf32>, vector<32x128xf32>, vector<8x128xf32> -> vector<8x128xf32>
    %cst_17 = arith.constant dense<0.000000e+00> : vector<8x128xf32>
    %28 = tpu.matmul %0, %12, %cst_17 {dimension_numbers = #tpu.dot_dimension_numbers<[1], [0], [0], [1], [0, 0, 1, 1], [], []>} : vector<8x32xf32>, vector<32x128xf32>, vector<8x128xf32> -> vector<8x128xf32>
    %29 = arith.addf %27, %28 : vector<8x128xf32>
    %30 = vector.broadcast %13 : vector<1x128xf32> to vector<8x128xf32>
    %31 = arith.addf %29, %30 : vector<8x128xf32>
    %32 = vector.extract_strided_slice %31 {offsets = [0, 0], sizes = [1, 128], strides = [1, 1]} : vector<8x128xf32> to vector<1x128xf32>
    %cst_18 = arith.constant dense<0.000000e+00> : vector<1x128xf32>
    %33 = tpu.matmul %1, %14, %cst_18 {dimension_numbers = #tpu.dot_dimension_numbers<[1], [0], [0], [1], [0, 0, 1, 1], [], []>} : vector<1x32xf32>, vector<32x128xf32>, vector<1x128xf32> -> vector<1x128xf32>
    %34 = arith.addf %32, %33 : vector<1x128xf32>
    %35 = math.tanh %34 : vector<1x128xf32>
    %36 = vector.extract_strided_slice %35 {offsets = [0, 0], sizes = [1, 96], strides = [1, 1]} : vector<1x128xf32> to vector<1x96xf32>
    %cst_19 = arith.constant 5.000000e-01 : f32
    %37 = vector.broadcast %cst_19 : f32 to vector<1x96xf32>
    %38 = arith.mulf %37, %36 : vector<1x96xf32>
    %cst_20 = arith.constant 5.000000e-01 : f32
    %39 = vector.broadcast %cst_20 : f32 to vector<1x96xf32>
    %40 = arith.addf %38, %39 : vector<1x96xf32>
    %41 = vector.extract_strided_slice %40 {offsets = [0, 0], sizes = [1, 32], strides = [1, 1]} : vector<1x96xf32> to vector<1x32xf32>
    %42 = vector.extract_strided_slice %40 {offsets = [0, 32], sizes = [1, 32], strides = [1, 1]} : vector<1x96xf32> to vector<1x32xf32>
    %43 = vector.extract_strided_slice %40 {offsets = [0, 64], sizes = [1, 32], strides = [1, 1]} : vector<1x96xf32> to vector<1x32xf32>
    %44 = vector.extract_strided_slice %35 {offsets = [0, 96], sizes = [1, 32], strides = [1, 1]} : vector<1x128xf32> to vector<1x32xf32>
    %45 = arith.mulf %42, %2 : vector<1x32xf32>
    %46 = arith.mulf %41, %44 : vector<1x32xf32>
    %47 = arith.addf %45, %46 : vector<1x32xf32>
    %48 = math.tanh %47 : vector<1x32xf32>
    %49 = arith.mulf %43, %48 : vector<1x32xf32>
    %50 = vector.extract_strided_slice %31 {offsets = [1, 0], sizes = [1, 128], strides = [1, 1]} : vector<8x128xf32> to vector<1x128xf32>
    %cst_21 = arith.constant dense<0.000000e+00> : vector<1x128xf32>
    %51 = tpu.matmul %49, %14, %cst_21 {dimension_numbers = #tpu.dot_dimension_numbers<[1], [0], [0], [1], [0, 0, 1, 1], [], []>} : vector<1x32xf32>, vector<32x128xf32>, vector<1x128xf32> -> vector<1x128xf32>
    %52 = arith.addf %50, %51 : vector<1x128xf32>
    %53 = math.tanh %52 : vector<1x128xf32>
    %54 = vector.extract_strided_slice %53 {offsets = [0, 0], sizes = [1, 96], strides = [1, 1]} : vector<1x128xf32> to vector<1x96xf32>
    %cst_22 = arith.constant 5.000000e-01 : f32
    %55 = vector.broadcast %cst_22 : f32 to vector<1x96xf32>
    %56 = arith.mulf %55, %54 : vector<1x96xf32>
    %cst_23 = arith.constant 5.000000e-01 : f32
    %57 = vector.broadcast %cst_23 : f32 to vector<1x96xf32>
    %58 = arith.addf %56, %57 : vector<1x96xf32>
    %59 = vector.extract_strided_slice %58 {offsets = [0, 0], sizes = [1, 32], strides = [1, 1]} : vector<1x96xf32> to vector<1x32xf32>
    %60 = vector.extract_strided_slice %58 {offsets = [0, 32], sizes = [1, 32], strides = [1, 1]} : vector<1x96xf32> to vector<1x32xf32>
    %61 = vector.extract_strided_slice %58 {offsets = [0, 64], sizes = [1, 32], strides = [1, 1]} : vector<1x96xf32> to vector<1x32xf32>
    %62 = vector.extract_strided_slice %53 {offsets = [0, 96], sizes = [1, 32], strides = [1, 1]} : vector<1x128xf32> to vector<1x32xf32>
    %63 = arith.mulf %60, %47 : vector<1x32xf32>
    %64 = arith.mulf %59, %62 : vector<1x32xf32>
    %65 = arith.addf %63, %64 : vector<1x32xf32>
    %66 = math.tanh %65 : vector<1x32xf32>
    %67 = arith.mulf %61, %66 : vector<1x32xf32>
    %68 = vector.extract_strided_slice %31 {offsets = [2, 0], sizes = [1, 128], strides = [1, 1]} : vector<8x128xf32> to vector<1x128xf32>
    %cst_24 = arith.constant dense<0.000000e+00> : vector<1x128xf32>
    %69 = tpu.matmul %67, %14, %cst_24 {dimension_numbers = #tpu.dot_dimension_numbers<[1], [0], [0], [1], [0, 0, 1, 1], [], []>} : vector<1x32xf32>, vector<32x128xf32>, vector<1x128xf32> -> vector<1x128xf32>
    %70 = arith.addf %68, %69 : vector<1x128xf32>
    %71 = math.tanh %70 : vector<1x128xf32>
    %72 = vector.extract_strided_slice %71 {offsets = [0, 0], sizes = [1, 96], strides = [1, 1]} : vector<1x128xf32> to vector<1x96xf32>
    %cst_25 = arith.constant 5.000000e-01 : f32
    %73 = vector.broadcast %cst_25 : f32 to vector<1x96xf32>
    %74 = arith.mulf %73, %72 : vector<1x96xf32>
    %cst_26 = arith.constant 5.000000e-01 : f32
    %75 = vector.broadcast %cst_26 : f32 to vector<1x96xf32>
    %76 = arith.addf %74, %75 : vector<1x96xf32>
    %77 = vector.extract_strided_slice %76 {offsets = [0, 0], sizes = [1, 32], strides = [1, 1]} : vector<1x96xf32> to vector<1x32xf32>
    %78 = vector.extract_strided_slice %76 {offsets = [0, 32], sizes = [1, 32], strides = [1, 1]} : vector<1x96xf32> to vector<1x32xf32>
    %79 = vector.extract_strided_slice %76 {offsets = [0, 64], sizes = [1, 32], strides = [1, 1]} : vector<1x96xf32> to vector<1x32xf32>
    %80 = vector.extract_strided_slice %71 {offsets = [0, 96], sizes = [1, 32], strides = [1, 1]} : vector<1x128xf32> to vector<1x32xf32>
    %81 = arith.mulf %78, %65 : vector<1x32xf32>
    %82 = arith.mulf %77, %80 : vector<1x32xf32>
    %83 = arith.addf %81, %82 : vector<1x32xf32>
    %84 = math.tanh %83 : vector<1x32xf32>
    %85 = arith.mulf %79, %84 : vector<1x32xf32>
    %86 = vector.extract_strided_slice %31 {offsets = [3, 0], sizes = [1, 128], strides = [1, 1]} : vector<8x128xf32> to vector<1x128xf32>
    %cst_27 = arith.constant dense<0.000000e+00> : vector<1x128xf32>
    %87 = tpu.matmul %85, %14, %cst_27 {dimension_numbers = #tpu.dot_dimension_numbers<[1], [0], [0], [1], [0, 0, 1, 1], [], []>} : vector<1x32xf32>, vector<32x128xf32>, vector<1x128xf32> -> vector<1x128xf32>
    %88 = arith.addf %86, %87 : vector<1x128xf32>
    %89 = math.tanh %88 : vector<1x128xf32>
    %90 = vector.extract_strided_slice %89 {offsets = [0, 0], sizes = [1, 96], strides = [1, 1]} : vector<1x128xf32> to vector<1x96xf32>
    %cst_28 = arith.constant 5.000000e-01 : f32
    %91 = vector.broadcast %cst_28 : f32 to vector<1x96xf32>
    %92 = arith.mulf %91, %90 : vector<1x96xf32>
    %cst_29 = arith.constant 5.000000e-01 : f32
    %93 = vector.broadcast %cst_29 : f32 to vector<1x96xf32>
    %94 = arith.addf %92, %93 : vector<1x96xf32>
    %95 = vector.extract_strided_slice %94 {offsets = [0, 0], sizes = [1, 32], strides = [1, 1]} : vector<1x96xf32> to vector<1x32xf32>
    %96 = vector.extract_strided_slice %94 {offsets = [0, 32], sizes = [1, 32], strides = [1, 1]} : vector<1x96xf32> to vector<1x32xf32>
    %97 = vector.extract_strided_slice %94 {offsets = [0, 64], sizes = [1, 32], strides = [1, 1]} : vector<1x96xf32> to vector<1x32xf32>
    %98 = vector.extract_strided_slice %89 {offsets = [0, 96], sizes = [1, 32], strides = [1, 1]} : vector<1x128xf32> to vector<1x32xf32>
    %99 = arith.mulf %96, %83 : vector<1x32xf32>
    %100 = arith.mulf %95, %98 : vector<1x32xf32>
    %101 = arith.addf %99, %100 : vector<1x32xf32>
    %102 = math.tanh %101 : vector<1x32xf32>
    %103 = arith.mulf %97, %102 : vector<1x32xf32>
    %104 = vector.extract_strided_slice %31 {offsets = [4, 0], sizes = [1, 128], strides = [1, 1]} : vector<8x128xf32> to vector<1x128xf32>
    %cst_30 = arith.constant dense<0.000000e+00> : vector<1x128xf32>
    %105 = tpu.matmul %103, %14, %cst_30 {dimension_numbers = #tpu.dot_dimension_numbers<[1], [0], [0], [1], [0, 0, 1, 1], [], []>} : vector<1x32xf32>, vector<32x128xf32>, vector<1x128xf32> -> vector<1x128xf32>
    %106 = arith.addf %104, %105 : vector<1x128xf32>
    %107 = math.tanh %106 : vector<1x128xf32>
    %108 = vector.extract_strided_slice %107 {offsets = [0, 0], sizes = [1, 96], strides = [1, 1]} : vector<1x128xf32> to vector<1x96xf32>
    %cst_31 = arith.constant 5.000000e-01 : f32
    %109 = vector.broadcast %cst_31 : f32 to vector<1x96xf32>
    %110 = arith.mulf %109, %108 : vector<1x96xf32>
    %cst_32 = arith.constant 5.000000e-01 : f32
    %111 = vector.broadcast %cst_32 : f32 to vector<1x96xf32>
    %112 = arith.addf %110, %111 : vector<1x96xf32>
    %113 = vector.extract_strided_slice %112 {offsets = [0, 0], sizes = [1, 32], strides = [1, 1]} : vector<1x96xf32> to vector<1x32xf32>
    %114 = vector.extract_strided_slice %112 {offsets = [0, 32], sizes = [1, 32], strides = [1, 1]} : vector<1x96xf32> to vector<1x32xf32>
    %115 = vector.extract_strided_slice %112 {offsets = [0, 64], sizes = [1, 32], strides = [1, 1]} : vector<1x96xf32> to vector<1x32xf32>
    %116 = vector.extract_strided_slice %107 {offsets = [0, 96], sizes = [1, 32], strides = [1, 1]} : vector<1x128xf32> to vector<1x32xf32>
    %117 = arith.mulf %114, %101 : vector<1x32xf32>
    %118 = arith.mulf %113, %116 : vector<1x32xf32>
    %119 = arith.addf %117, %118 : vector<1x32xf32>
    %120 = math.tanh %119 : vector<1x32xf32>
    %121 = arith.mulf %115, %120 : vector<1x32xf32>
    %122 = vector.extract_strided_slice %31 {offsets = [5, 0], sizes = [1, 128], strides = [1, 1]} : vector<8x128xf32> to vector<1x128xf32>
    %cst_33 = arith.constant dense<0.000000e+00> : vector<1x128xf32>
    %123 = tpu.matmul %121, %14, %cst_33 {dimension_numbers = #tpu.dot_dimension_numbers<[1], [0], [0], [1], [0, 0, 1, 1], [], []>} : vector<1x32xf32>, vector<32x128xf32>, vector<1x128xf32> -> vector<1x128xf32>
    %124 = arith.addf %122, %123 : vector<1x128xf32>
    %125 = math.tanh %124 : vector<1x128xf32>
    %126 = vector.extract_strided_slice %125 {offsets = [0, 0], sizes = [1, 96], strides = [1, 1]} : vector<1x128xf32> to vector<1x96xf32>
    %cst_34 = arith.constant 5.000000e-01 : f32
    %127 = vector.broadcast %cst_34 : f32 to vector<1x96xf32>
    %128 = arith.mulf %127, %126 : vector<1x96xf32>
    %cst_35 = arith.constant 5.000000e-01 : f32
    %129 = vector.broadcast %cst_35 : f32 to vector<1x96xf32>
    %130 = arith.addf %128, %129 : vector<1x96xf32>
    %131 = vector.extract_strided_slice %130 {offsets = [0, 0], sizes = [1, 32], strides = [1, 1]} : vector<1x96xf32> to vector<1x32xf32>
    %132 = vector.extract_strided_slice %130 {offsets = [0, 32], sizes = [1, 32], strides = [1, 1]} : vector<1x96xf32> to vector<1x32xf32>
    %133 = vector.extract_strided_slice %130 {offsets = [0, 64], sizes = [1, 32], strides = [1, 1]} : vector<1x96xf32> to vector<1x32xf32>
    %134 = vector.extract_strided_slice %125 {offsets = [0, 96], sizes = [1, 32], strides = [1, 1]} : vector<1x128xf32> to vector<1x32xf32>
    %135 = arith.mulf %132, %119 : vector<1x32xf32>
    %136 = arith.mulf %131, %134 : vector<1x32xf32>
    %137 = arith.addf %135, %136 : vector<1x32xf32>
    %138 = math.tanh %137 : vector<1x32xf32>
    %139 = arith.mulf %133, %138 : vector<1x32xf32>
    %140 = vector.extract_strided_slice %31 {offsets = [6, 0], sizes = [1, 128], strides = [1, 1]} : vector<8x128xf32> to vector<1x128xf32>
    %cst_36 = arith.constant dense<0.000000e+00> : vector<1x128xf32>
    %141 = tpu.matmul %139, %14, %cst_36 {dimension_numbers = #tpu.dot_dimension_numbers<[1], [0], [0], [1], [0, 0, 1, 1], [], []>} : vector<1x32xf32>, vector<32x128xf32>, vector<1x128xf32> -> vector<1x128xf32>
    %142 = arith.addf %140, %141 : vector<1x128xf32>
    %143 = math.tanh %142 : vector<1x128xf32>
    %144 = vector.extract_strided_slice %143 {offsets = [0, 0], sizes = [1, 96], strides = [1, 1]} : vector<1x128xf32> to vector<1x96xf32>
    %cst_37 = arith.constant 5.000000e-01 : f32
    %145 = vector.broadcast %cst_37 : f32 to vector<1x96xf32>
    %146 = arith.mulf %145, %144 : vector<1x96xf32>
    %cst_38 = arith.constant 5.000000e-01 : f32
    %147 = vector.broadcast %cst_38 : f32 to vector<1x96xf32>
    %148 = arith.addf %146, %147 : vector<1x96xf32>
    %149 = vector.extract_strided_slice %148 {offsets = [0, 0], sizes = [1, 32], strides = [1, 1]} : vector<1x96xf32> to vector<1x32xf32>
    %150 = vector.extract_strided_slice %148 {offsets = [0, 32], sizes = [1, 32], strides = [1, 1]} : vector<1x96xf32> to vector<1x32xf32>
    %151 = vector.extract_strided_slice %148 {offsets = [0, 64], sizes = [1, 32], strides = [1, 1]} : vector<1x96xf32> to vector<1x32xf32>
    %152 = vector.extract_strided_slice %143 {offsets = [0, 96], sizes = [1, 32], strides = [1, 1]} : vector<1x128xf32> to vector<1x32xf32>
    %153 = arith.mulf %150, %137 : vector<1x32xf32>
    %154 = arith.mulf %149, %152 : vector<1x32xf32>
    %155 = arith.addf %153, %154 : vector<1x32xf32>
    %156 = math.tanh %155 : vector<1x32xf32>
    %157 = arith.mulf %151, %156 : vector<1x32xf32>
    %158 = vector.extract_strided_slice %31 {offsets = [7, 0], sizes = [1, 128], strides = [1, 1]} : vector<8x128xf32> to vector<1x128xf32>
    %cst_39 = arith.constant dense<0.000000e+00> : vector<1x128xf32>
    %159 = tpu.matmul %157, %14, %cst_39 {dimension_numbers = #tpu.dot_dimension_numbers<[1], [0], [0], [1], [0, 0, 1, 1], [], []>} : vector<1x32xf32>, vector<32x128xf32>, vector<1x128xf32> -> vector<1x128xf32>
    %160 = arith.addf %158, %159 : vector<1x128xf32>
    %161 = math.tanh %160 : vector<1x128xf32>
    %162 = vector.extract_strided_slice %161 {offsets = [0, 0], sizes = [1, 96], strides = [1, 1]} : vector<1x128xf32> to vector<1x96xf32>
    %cst_40 = arith.constant 5.000000e-01 : f32
    %163 = vector.broadcast %cst_40 : f32 to vector<1x96xf32>
    %164 = arith.mulf %163, %162 : vector<1x96xf32>
    %cst_41 = arith.constant 5.000000e-01 : f32
    %165 = vector.broadcast %cst_41 : f32 to vector<1x96xf32>
    %166 = arith.addf %164, %165 : vector<1x96xf32>
    %167 = vector.extract_strided_slice %166 {offsets = [0, 0], sizes = [1, 32], strides = [1, 1]} : vector<1x96xf32> to vector<1x32xf32>
    %168 = vector.extract_strided_slice %166 {offsets = [0, 32], sizes = [1, 32], strides = [1, 1]} : vector<1x96xf32> to vector<1x32xf32>
    %169 = vector.extract_strided_slice %166 {offsets = [0, 64], sizes = [1, 32], strides = [1, 1]} : vector<1x96xf32> to vector<1x32xf32>
    %170 = vector.extract_strided_slice %161 {offsets = [0, 96], sizes = [1, 32], strides = [1, 1]} : vector<1x128xf32> to vector<1x32xf32>
    %171 = arith.mulf %168, %155 : vector<1x32xf32>
    %172 = arith.mulf %167, %170 : vector<1x32xf32>
    %173 = arith.addf %171, %172 : vector<1x32xf32>
    %174 = math.tanh %173 : vector<1x32xf32>
    %175 = arith.mulf %169, %174 : vector<1x32xf32>
    %176 = tpu.concatenate %49, %67, %85, %103, %121, %139, %157, %175 in 0 : vector<1x32xf32>, vector<1x32xf32>, vector<1x32xf32>, vector<1x32xf32>, vector<1x32xf32>, vector<1x32xf32>, vector<1x32xf32>, vector<1x32xf32> -> vector<8x32xf32>
    %177 = vector.broadcast %9 : vector<1x32xf32> to vector<8x32xf32>
    %178 = arith.mulf %176, %177 : vector<8x32xf32>
    %cst_42 = arith.constant dense<0.000000e+00> : vector<8xf32>
    %179 = vector.multi_reduction <add>, %178, %cst_42 [1] : vector<8x32xf32> to vector<8xf32>
    %180 = vector.shape_cast %179 : vector<8xf32> to vector<8x1xf32>
    %181 = vector.broadcast %10 : vector<1x1xf32> to vector<8x1xf32>
    %182 = arith.addf %180, %181 : vector<8x1xf32>
    %c0_43 = arith.constant 0 : index
    %c0_44 = arith.constant 0 : index
    %183 = vector.load %arg2[%c0_43, %c0_44] : memref<8x1xf32, #tpu.memory_space<vmem>>, vector<8x1xf32>
    tpu.vector_store %arg2[%c0_43, %c0_44], %182 {strides = array<i32>} : memref<8x1xf32, #tpu.memory_space<vmem>>, vector<8x1xf32>,
    return
  }
}

</mosaic_0001>

<llo_original>
// kernel: tpu_custom_call.1
$region0: #{tpu_custom_call.1}
  #allocation0 [shape = 'u32[]', space=smem, size = 0x4, offset = 0x4, fixed_abs, tag = 'smem constant byte address 0x4 - core index']
  #allocation1 [shape = 'u32[72,128]{1,0:T(1,128)}', space=vmem, size = 0x9000, scoped, tag = 'internal scratch']
  %s0 = inlined_call_operand.hbm [shape: f32[16,32], index: 0, kind: input, shape index: {}]
  %s1 = inlined_call_operand.hbm [shape: f32[208,128], index: 1, kind: input, shape index: {}]
  %s2 = inlined_call_operand.vmem [shape: f32[8,1], index: 2, kind: output, shape index: {}]
  %s3 = sld [smem:[#allocation0]]
  $region26: #{tpu_custom_call.1} parent=0
    _
  %s5 = ssub.s32 1, %s3
  %s6 = scalar_select 0, %s5, %s3
  $region1: #{tpu_custom_call.1} parent=0
    #allocation2 [shape = 'u8[8192]{0}', space=vmem, size = 0x2000, scoped, tag = 'input window, operand 0, single buffered']
    #allocation3 [shape = 's32[1]{0}', space=sflag, size = 0x4, scoped, tag = 'scoped memory for tpu_custom_call.1']
    #allocation4 [shape = 'u8[106496]{0}', space=vmem, size = 0x1a000, scoped, tag = 'input window, operand 1, single buffered']
    #allocation5 [shape = 's32[1]{0}', space=sflag, size = 0x4, scoped, tag = 'scoped memory for tpu_custom_call.1']
    %7 = vsyncpa [#allocation3], 0
    %8 = vsyncpa [#allocation5], 0
    // Predicated region
    $region2: #{tpu_custom_call.1} parent=1 // pred_check
      _
    $region3: #{tpu_custom_call.1} parent=1 // pred_check_branch
      %10 = sbr.rel (0) target = $region5
    $region4: #{tpu_custom_call.1} parent=1 // pred_region
      %12 = vsyncadd [#allocation3], 0
      %s13 = sshll.u32 %s0, 4
      %s14 = int_to_ptr.hbm [resolvable:$true] %s13
      %s15 = sshll.u32 [#allocation2], 4
      %s16 = int_to_ptr.vmem [resolvable:$true] %s15
      %21 = dma.hbm_to_vmem [thread:$0]  %s14, 256, %s16, [#allocation3], 128, 128, 8
    $region5: #{tpu_custom_call.1} parent=1 // pred_fallthru
      _
    // Predicated region
    $region6: #{tpu_custom_call.1} parent=1 // pred_check
      _
    $region7: #{tpu_custom_call.1} parent=1 // pred_check_branch
      %23 = sbr.rel (0) target = $region9
    $region8: #{tpu_custom_call.1} parent=1 // pred_region
      %25 = vsyncadd [#allocation5], 0
      %s26 = sshll.u32 %s1, 4
      %s27 = int_to_ptr.hbm [resolvable:$true] %s26
      %s28 = sshll.u32 [#allocation4], 4
      %s29 = int_to_ptr.vmem [resolvable:$true] %s28
      %34 = dma.hbm_to_vmem [thread:$0]  %s27, 3328, %s29, [#allocation5], 128, 128, 8
    $region9: #{tpu_custom_call.1} parent=1 // pred_fallthru
      _
    // Predicated region
    $region10: #{tpu_custom_call.1} parent=1 // pred_check
      _
    $region11: #{tpu_custom_call.1} parent=1 // pred_check_branch
      %36 = sbr.rel (0) target = $region13
    $region12: #{tpu_custom_call.1} parent=1 // pred_region
      %38 = dma.done [#allocation3], 256
    $region13: #{tpu_custom_call.1} parent=1 // pred_fallthru
      _
    // Predicated region
    $region14: #{tpu_custom_call.1} parent=1 // pred_check
      _
    $region15: #{tpu_custom_call.1} parent=1 // pred_check_branch
      %40 = sbr.rel (0) target = $region17
    $region16: #{tpu_custom_call.1} parent=1 // pred_region
      %42 = dma.done [#allocation5], 3328
    $region17: #{tpu_custom_call.1} parent=1 // pred_fallthru
      _
    %v43 = vld [vmem:[#allocation2] sm:$0xff]
    %v44 = vld [vmem:[#allocation2 + $0x8] sm:$0x1]
    %v45 = vld [vmem:[#allocation2 + $0x9] sm:$0x1]
    %v46 = vld [vmem:[#allocation4] sm:$0xff]
    %v47 = vld [vmem:[#allocation4 + $0x8] sm:$0xff]
    %v48 = vld [vmem:[#allocation4 + $0x10] sm:$0xff]
    %v49 = vld [vmem:[#allocation4 + $0x18] sm:$0xff]
    %v50 = vld [vmem:[#allocation4 + $0x20] sm:$0xff]
    %v51 = vld [vmem:[#allocation4 + $0x28] sm:$0xff]
    %v52 = vld [vmem:[#allocation4 + $0x30] sm:$0xff]
    %v53 = vld [vmem:[#allocation4 + $0x38] sm:$0xff]
    %v54 = vld [vmem:[#allocation4 + $0x40] sm:$0xff]
    %v55 = vld [vmem:[#allocation4 + $0x48] sm:$0xff]
    %v56 = vld [vmem:[#allocation4 + $0x50] sm:$0xff]
    %v57 = vld [vmem:[#allocation4 + $0x58] sm:$0xff]
    %v58 = vld [vmem:[#allocation4 + $0x60] sm:$0xff]
    %v59 = vld [vmem:[#allocation4 + $0x68] sm:$0xff]
    %v60 = vld [vmem:[#allocation4 + $0x70] sm:$0xff]
    %v61 = vld [vmem:[#allocation4 + $0x78] sm:$0xff]
    %v62 = vld [vmem:[#allocation4 + $0x80] sm:$0xff]
    %v63 = vld [vmem:[#allocation4 + $0x88] sm:$0xff]
    %v64 = vld [vmem:[#allocation4 + $0x90] sm:$0xff]
    %v65 = vld [vmem:[#allocation4 + $0x98] sm:$0xff]
    %v66 = vld [vmem:[#allocation4 + $0xa0] sm:$0xff]
    %v67 = vld [vmem:[#allocation4 + $0xa8] sm:$0x1]
    %v68 = vld [vmem:[#allocation4 + $0xb0] sm:$0xff]
    %v69 = vld [vmem:[#allocation4 + $0xb8] sm:$0xff]
    %v70 = vld [vmem:[#allocation4 + $0xc0] sm:$0xff]
    %v71 = vld [vmem:[#allocation4 + $0xc8] sm:$0xff]
    %v72 = vperm.slane %v58, 0
    %vm73 = vcmask 261120
    %v75 = vsel %vm73, %v43, 0
    %77 = vmatpush.msra.mxu0 0.0
    %78 = vmatpush.msra.mxu0 0.0
    %79 = vmatpush.msra.mxu0 0.0
    %80 = vmatpush.msra.mxu0 0.0
    %81 = vmatpush.msra.mxu0 0.0
    %82 = vmatpush.msra.mxu0 0.0
    %83 = vmatpush.msra.mxu0 0.0
    %84 = vmatpush.msra.mxu0 0.0
    %85 = vmatpush.msra.mxu0 0.0
    %86 = vmatpush.msra.mxu0 0.0
    %87 = vmatpush.msra.mxu0 0.0
    %88 = vmatpush.msra.mxu0 0.0
    %89 = vmatpush.msra.mxu0 %v49
    %90 = vmatpush.msra.mxu0 %v48
    %91 = vmatpush.msra.mxu0 %v47
    %92 = vmatpush.msra.mxu0 %v46
    %93 = vmatmul.f32.gmra.mxu0 %v75
    %v94 = vpop.f32.mrf.mxu0
    %v95 = vadd.f32 %v72, %v94
    %96 = vdwg.mxu0
    %v97 = vmax.f32 %v95, 0.0
    %98 = vmatpush.msra.mxu0 0.0
    %99 = vmatpush.msra.mxu0 0.0
    %100 = vmatpush.msra.mxu0 0.0
    %101 = vmatpush.msra.mxu0 0.0
    %102 = vmatpush.msra.mxu0 0.0
    %103 = vmatpush.msra.mxu0 0.0
    %104 = vmatpush.msra.mxu0 0.0
    %105 = vmatpush.msra.mxu0 0.0
    %106 = vmatpush.msra.mxu0 0.0
    %107 = vmatpush.msra.mxu0 0.0
    %108 = vmatpush.msra.mxu0 0.0
    %109 = vmatpush.msra.mxu0 0.0
    %110 = vmatpush.msra.mxu0 %v57
    %111 = vmatpush.msra.mxu0 %v56
    %112 = vmatpush.msra.mxu0 %v55
    %113 = vmatpush.msra.mxu0 %v54
    %114 = vmatmul.f32.gmra.mxu0 %v75
    %v115 = vpop.f32.mrf.mxu0
    %v116 = vadd.f32 0.0, %v115
    %117 = vdwg.mxu0
    %v119 = vsel %vm73, %v97, 0
    %121 = vmatpush.msra.mxu0 0.0
    %122 = vmatpush.msra.mxu0 0.0
    %123 = vmatpush.msra.mxu0 0.0
    %124 = vmatpush.msra.mxu0 0.0
    %125 = vmatpush.msra.mxu0 0.0
    %126 = vmatpush.msra.mxu0 0.0
    %127 = vmatpush.msra.mxu0 0.0
    %128 = vmatpush.msra.mxu0 0.0
    %129 = vmatpush.msra.mxu0 0.0
    %130 = vmatpush.msra.mxu0 0.0
    %131 = vmatpush.msra.mxu0 0.0
    %132 = vmatpush.msra.mxu0 0.0
    %133 = vmatpush.msra.mxu0 %v53
    %134 = vmatpush.msra.mxu0 %v52
    %135 = vmatpush.msra.mxu0 %v51
    %136 = vmatpush.msra.mxu0 %v50
    %137 = vmatmul.f32.gmra.mxu0 %v119
    %v138 = vpop.f32.mrf.mxu0
    %v139 = vadd.f32 %v116, %v138
    %140 = vdwg.mxu0
    %v141 = vperm.slane %v58, 1
    %v142 = vadd.f32 %v139, %v141
    %v143 = vmax.f32 %v142, 0.0
    %144 = vmatpush.msra.mxu0 0.0
    %145 = vmatpush.msra.mxu0 0.0
    %146 = vmatpush.msra.mxu0 0.0
    %147 = vmatpush.msra.mxu0 0.0
    %148 = vmatpush.msra.mxu0 0.0
    %149 = vmatpush.msra.mxu0 0.0
    %150 = vmatpush.msra.mxu0 0.0
    %151 = vmatpush.msra.mxu0 0.0
    %152 = vmatpush.msra.mxu0 0.0
    %153 = vmatpush.msra.mxu0 0.0
    %154 = vmatpush.msra.mxu0 0.0
    %155 = vmatpush.msra.mxu0 0.0
    %156 = vmatpush.msra.mxu0 %v66
    %157 = vmatpush.msra.mxu0 %v65
    %158 = vmatpush.msra.mxu0 %v64
    %159 = vmatpush.msra.mxu0 %v63
    %160 = vmatmul.f32.gmra.mxu0 %v75
    %v161 = vpop.f32.mrf.mxu0
    %v162 = vadd.f32 0.0, %v161
    %163 = vdwg.mxu0
    %v165 = vsel %vm73, %v143, 0
    %167 = vmatpush.msra.mxu0 0.0
    %168 = vmatpush.msra.mxu0 0.0
    %169 = vmatpush.msra.mxu0 0.0
    %170 = vmatpush.msra.mxu0 0.0
    %171 = vmatpush.msra.mxu0 0.0
    %172 = vmatpush.msra.mxu0 0.0
    %173 = vmatpush.msra.mxu0 0.0
    %174 = vmatpush.msra.mxu0 0.0
    %175 = vmatpush.msra.mxu0 0.0
    %176 = vmatpush.msra.mxu0 0.0
    %177 = vmatpush.msra.mxu0 0.0
    %178 = vmatpush.msra.mxu0 0.0
    %179 = vmatpush.msra.mxu0 %v62
    %180 = vmatpush.msra.mxu0 %v61
    %181 = vmatpush.msra.mxu0 %v60
    %182 = vmatpush.msra.mxu0 %v59
    %183 = vmatmul.f32.gmra.mxu0 %v165
    %v184 = vpop.f32.mrf.mxu0
    %v185 = vadd.f32 %v162, %v184
    %186 = vdwg.mxu0
    %v187 = vperm.slane %v67, 0
    %v188 = vadd.f32 %v185, %v187
    %v190 = vsel %vm73, %v44, 0
    %192 = vmatpush.msra.mxu0 0.0
    %193 = vmatpush.msra.mxu0 0.0
    %194 = vmatpush.msra.mxu0 0.0
    %195 = vmatpush.msra.mxu0 0.0
    %196 = vmatpush.msra.mxu0 0.0
    %197 = vmatpush.msra.mxu0 0.0
    %198 = vmatpush.msra.mxu0 0.0
    %199 = vmatpush.msra.mxu0 0.0
    %200 = vmatpush.msra.mxu0 0.0
    %201 = vmatpush.msra.mxu0 0.0
    %202 = vmatpush.msra.mxu0 0.0
    %203 = vmatpush.msra.mxu0 0.0
    %204 = vmatpush.msra.mxu0 %v71
    %205 = vmatpush.msra.mxu0 %v70
    %206 = vmatpush.msra.mxu0 %v69
    %207 = vmatpush.msra.mxu0 %v68
    %208 = vmatmul.f32.gmra.mxu0 %v190
    %v209 = vpop.f32.mrf.mxu0
    %v210 = vadd.f32 0.0, %v209
    %211 = vdwg.mxu0
    %v212 = vadd.f32 %v188, %v210
    %v213 = vtanh.pop %v212
    %v214 = vmul.f32 %v213, 0.5
    %v215 = vadd.f32 %v214, 0.5
    %217 = vrot.lane.b32.xlu0 %v45, 32
    %v218 = vpop.permute.xlu0 %217
    %v220 = vmul.f32 %v215, %v218
    %222 = vrot.lane.b32.xlu0 %v213, 32
    %v223 = vpop.permute.xlu0 %222
    %v225 = vmul.f32 %v215, %v223
    %227 = vrot.lane.b32.xlu0 %v225, 32
    %v228 = vpop.permute.xlu0 %227
    %v230 = vadd.f32 %v220, %v228
    %v231 = vtanh.pop %v230
    %233 = vrot.lane.b32.xlu0 %v231, 32
    %v234 = vpop.permute.xlu0 %233
    %v236 = vmul.f32 %v215, %v234
    %238 = vrot.lane.b32.xlu0 %v236, 64
    %v239 = vpop.permute.xlu0 %238
    %v240 = vsel %vm73, %v239, 0
    %242 = vmatpush.msra.mxu0 0.0
    %243 = vmatpush.msra.mxu0 0.0
    %244 = vmatpush.msra.mxu0 0.0
    %245 = vmatpush.msra.mxu0 0.0
    %246 = vmatpush.msra.mxu0 0.0
    %247 = vmatpush.msra.mxu0 0.0
    %248 = vmatpush.msra.mxu0 0.0
    %249 = vmatpush.msra.mxu0 0.0
    %250 = vmatpush.msra.mxu0 0.0
    %251 = vmatpush.msra.mxu0 0.0
    %252 = vmatpush.msra.mxu0 0.0
    %253 = vmatpush.msra.mxu0 0.0
    %254 = vmatpush.msra.mxu0 %v71
    %255 = vmatpush.msra.mxu0 %v70
    %256 = vmatpush.msra.mxu0 %v69
    %257 = vmatpush.msra.mxu0 %v68
    %258 = vmatmul.f32.gmra.mxu0 %v240
    %v259 = vpop.f32.mrf.mxu0
    %v260 = vadd.f32 0.0, %v259
    %261 = vdwg.mxu0
    %v263 = vrot.slane %v260, 7
    %v265 = vadd.f32 %v188, %v263
    %v266 = vtanh.pop %v265
    %v267 = vmul.f32 %v266, 0.5
    %v268 = vadd.f32 %v267, 0.5
    %v270 = vrot.slane %v230, 7
    %v272 = vmul.f32 %v268, %v270
    %274 = vrot.lane.b32.xlu0 %v266, 32
    %v275 = vpop.permute.xlu0 %274
    %v277 = vmul.f32 %v268, %v275
    %279 = vrot.lane.b32.xlu0 %v277, 32
    %v280 = vpop.permute.xlu0 %279
    %v282 = vadd.f32 %v272, %v280
    %v283 = vtanh.pop %v282
    %285 = vrot.lane.b32.xlu0 %v283, 32
    %v286 = vpop.permute.xlu0 %285
    %v288 = vmul.f32 %v268, %v286
    %v290 = vrot.slane %v288, 1
    %291 = vrot.lane.b32.xlu0 %v290, 64
    %v292 = vpop.permute.xlu0 %291
    %v293 = vsel %vm73, %v292, 0
    %295 = vmatpush.msra.mxu0 0.0
    %296 = vmatpush.msra.mxu0 0.0
    %297 = vmatpush.msra.mxu0 0.0
    %298 = vmatpush.msra.mxu0 0.0
    %299 = vmatpush.msra.mxu0 0.0
    %300 = vmatpush.msra.mxu0 0.0
    %301 = vmatpush.msra.mxu0 0.0
    %302 = vmatpush.msra.mxu0 0.0
    %303 = vmatpush.msra.mxu0 0.0
    %304 = vmatpush.msra.mxu0 0.0
    %305 = vmatpush.msra.mxu0 0.0
    %306 = vmatpush.msra.mxu0 0.0
    %307 = vmatpush.msra.mxu0 %v71
    %308 = vmatpush.msra.mxu0 %v70
    %309 = vmatpush.msra.mxu0 %v69
    %310 = vmatpush.msra.mxu0 %v68
    %311 = vmatmul.f32.gmra.mxu0 %v293
    %v312 = vpop.f32.mrf.mxu0
    %v313 = vadd.f32 0.0, %v312
    %314 = vdwg.mxu0
    %v316 = vrot.slane %v313, 6
    %v318 = vadd.f32 %v188, %v316
    %v319 = vtanh.pop %v318
    %v320 = vmul.f32 %v319, 0.5
    %v321 = vadd.f32 %v320, 0.5
    %v323 = vrot.slane %v282, 7
    %v325 = vmul.f32 %v321, %v323
    %327 = vrot.lane.b32.xlu0 %v319, 32
    %v328 = vpop.permute.xlu0 %327
    %v330 = vmul.f32 %v321, %v328
    %332 = vrot.lane.b32.xlu0 %v330, 32
    %v333 = vpop.permute.xlu0 %332
    %v335 = vadd.f32 %v325, %v333
    %v336 = vtanh.pop %v335
    %338 = vrot.lane.b32.xlu0 %v336, 32
    %v339 = vpop.permute.xlu0 %338
    %v341 = vmul.f32 %v321, %v339
    %v343 = vrot.slane %v341, 2
    %344 = vrot.lane.b32.xlu0 %v343, 64
    %v345 = vpop.permute.xlu0 %344
    %v346 = vsel %vm73, %v345, 0
    %348 = vmatpush.msra.mxu0 0.0
    %349 = vmatpush.msra.mxu0 0.0
    %350 = vmatpush.msra.mxu0 0.0
    %351 = vmatpush.msra.mxu0 0.0
    %352 = vmatpush.msra.mxu0 0.0
    %353 = vmatpush.msra.mxu0 0.0
    %354 = vmatpush.msra.mxu0 0.0
    %355 = vmatpush.msra.mxu0 0.0
    %356 = vmatpush.msra.mxu0 0.0
    %357 = vmatpush.msra.mxu0 0.0
    %358 = vmatpush.msra.mxu0 0.0
    %359 = vmatpush.msra.mxu0 0.0
    %360 = vmatpush.msra.mxu0 %v71
    %361 = vmatpush.msra.mxu0 %v70
    %362 = vmatpush.msra.mxu0 %v69
    %363 = vmatpush.msra.mxu0 %v68
    %364 = vmatmul.f32.gmra.mxu0 %v346
    %v365 = vpop.f32.mrf.mxu0
    %v366 = vadd.f32 0.0, %v365
    %367 = vdwg.mxu0
    %v369 = vrot.slane %v366, 5
    %v371 = vadd.f32 %v188, %v369
    %v372 = vtanh.pop %v371
    %v373 = vmul.f32 %v372, 0.5
    %v374 = vadd.f32 %v373, 0.5
    %v376 = vrot.slane %v335, 7
    %v378 = vmul.f32 %v374, %v376
    %380 = vrot.lane.b32.xlu0 %v372, 32
    %v381 = vpop.permute.xlu0 %380
    %v383 = vmul.f32 %v374, %v381
    %385 = vrot.lane.b32.xlu0 %v383, 32
    %v386 = vpop.permute.xlu0 %385
    %v388 = vadd.f32 %v378, %v386
    %v389 = vtanh.pop %v388
    %391 = vrot.lane.b32.xlu0 %v389, 32
    %v392 = vpop.permute.xlu0 %391
    %v394 = vmul.f32 %v374, %v392
    %v396 = vrot.slane %v394, 3
    %397 = vrot.lane.b32.xlu0 %v396, 64
    %v398 = vpop.permute.xlu0 %397
    %v399 = vsel %vm73, %v398, 0
    %401 = vmatpush.msra.mxu0 0.0
    %402 = vmatpush.msra.mxu0 0.0
    %403 = vmatpush.msra.mxu0 0.0
    %404 = vmatpush.msra.mxu0 0.0
    %405 = vmatpush.msra.mxu0 0.0
    %406 = vmatpush.msra.mxu0 0.0
    %407 = vmatpush.msra.mxu0 0.0
    %408 = vmatpush.msra.mxu0 0.0
    %409 = vmatpush.msra.mxu0 0.0
    %410 = vmatpush.msra.mxu0 0.0
    %411 = vmatpush.msra.mxu0 0.0
    %412 = vmatpush.msra.mxu0 0.0
    %413 = vmatpush.msra.mxu0 %v71
    %414 = vmatpush.msra.mxu0 %v70
    %415 = vmatpush.msra.mxu0 %v69
    %416 = vmatpush.msra.mxu0 %v68
    %417 = vmatmul.f32.gmra.mxu0 %v399
    %v418 = vpop.f32.mrf.mxu0
    %v419 = vadd.f32 0.0, %v418
    %420 = vdwg.mxu0
    %v422 = vrot.slane %v419, 4
    %v424 = vadd.f32 %v188, %v422
    %v425 = vtanh.pop %v424
    %v426 = vmul.f32 %v425, 0.5
    %v427 = vadd.f32 %v426, 0.5
    %v429 = vrot.slane %v388, 7
    %v431 = vmul.f32 %v427, %v429
    %433 = vrot.lane.b32.xlu0 %v425, 32
    %v434 = vpop.permute.xlu0 %433
    %v436 = vmul.f32 %v427, %v434
    %438 = vrot.lane.b32.xlu0 %v436, 32
    %v439 = vpop.permute.xlu0 %438
    %v441 = vadd.f32 %v431, %v439
    %v442 = vtanh.pop %v441
    %444 = vrot.lane.b32.xlu0 %v442, 32
    %v445 = vpop.permute.xlu0 %444
    %v447 = vmul.f32 %v427, %v445
    %v449 = vrot.slane %v447, 4
    %450 = vrot.lane.b32.xlu0 %v449, 64
    %v451 = vpop.permute.xlu0 %450
    %v452 = vsel %vm73, %v451, 0
    %454 = vmatpush.msra.mxu0 0.0
    %455 = vmatpush.msra.mxu0 0.0
    %456 = vmatpush.msra.mxu0 0.0
    %457 = vmatpush.msra.mxu0 0.0
    %458 = vmatpush.msra.mxu0 0.0
    %459 = vmatpush.msra.mxu0 0.0
    %460 = vmatpush.msra.mxu0 0.0
    %461 = vmatpush.msra.mxu0 0.0
    %462 = vmatpush.msra.mxu0 0.0
    %463 = vmatpush.msra.mxu0 0.0
    %464 = vmatpush.msra.mxu0 0.0
    %465 = vmatpush.msra.mxu0 0.0
    %466 = vmatpush.msra.mxu0 %v71
    %467 = vmatpush.msra.mxu0 %v70
    %468 = vmatpush.msra.mxu0 %v69
    %469 = vmatpush.msra.mxu0 %v68
    %470 = vmatmul.f32.gmra.mxu0 %v452
    %v471 = vpop.f32.mrf.mxu0
    %v472 = vadd.f32 0.0, %v471
    %473 = vdwg.mxu0
    %v475 = vrot.slane %v472, 3
    %v477 = vadd.f32 %v188, %v475
    %v478 = vtanh.pop %v477
    %v479 = vmul.f32 %v478, 0.5
    %v480 = vadd.f32 %v479, 0.5
    %v482 = vrot.slane %v441, 7
    %v484 = vmul.f32 %v480, %v482
    %486 = vrot.lane.b32.xlu0 %v478, 32
    %v487 = vpop.permute.xlu0 %486
    %v489 = vmul.f32 %v480, %v487
    %491 = vrot.lane.b32.xlu0 %v489, 32
    %v492 = vpop.permute.xlu0 %491
    %v494 = vadd.f32 %v484, %v492
    %v495 = vtanh.pop %v494
    %497 = vrot.lane.b32.xlu0 %v495, 32
    %v498 = vpop.permute.xlu0 %497
    %v500 = vmul.f32 %v480, %v498
    %v502 = vrot.slane %v500, 5
    %503 = vrot.lane.b32.xlu0 %v502, 64
    %v504 = vpop.permute.xlu0 %503
    %v505 = vsel %vm73, %v504, 0
    %507 = vmatpush.msra.mxu0 0.0
    %508 = vmatpush.msra.mxu0 0.0
    %509 = vmatpush.msra.mxu0 0.0
    %510 = vmatpush.msra.mxu0 0.0
    %511 = vmatpush.msra.mxu0 0.0
    %512 = vmatpush.msra.mxu0 0.0
    %513 = vmatpush.msra.mxu0 0.0
    %514 = vmatpush.msra.mxu0 0.0
    %515 = vmatpush.msra.mxu0 0.0
    %516 = vmatpush.msra.mxu0 0.0
    %517 = vmatpush.msra.mxu0 0.0
    %518 = vmatpush.msra.mxu0 0.0
    %519 = vmatpush.msra.mxu0 %v71
    %520 = vmatpush.msra.mxu0 %v70
    %521 = vmatpush.msra.mxu0 %v69
    %522 = vmatpush.msra.mxu0 %v68
    %523 = vmatmul.f32.gmra.mxu0 %v505
    %v524 = vpop.f32.mrf.mxu0
    %v525 = vadd.f32 0.0, %v524
    %526 = vdwg.mxu0
    %v528 = vrot.slane %v525, 2
    %v530 = vadd.f32 %v188, %v528
    %v531 = vtanh.pop %v530
    %v532 = vmul.f32 %v531, 0.5
    %v533 = vadd.f32 %v532, 0.5
    %v535 = vrot.slane %v494, 7
    %v537 = vmul.f32 %v533, %v535
    %539 = vrot.lane.b32.xlu0 %v531, 32
    %v540 = vpop.permute.xlu0 %539
    %v542 = vmul.f32 %v533, %v540
    %544 = vrot.lane.b32.xlu0 %v542, 32
    %v545 = vpop.permute.xlu0 %544
    %v547 = vadd.f32 %v537, %v545
    %v548 = vtanh.pop %v547
    %550 = vrot.lane.b32.xlu0 %v548, 32
    %v551 = vpop.permute.xlu0 %550
    %v553 = vmul.f32 %v533, %v551
    %v555 = vrot.slane %v553, 6
    %556 = vrot.lane.b32.xlu0 %v555, 64
    %v557 = vpop.permute.xlu0 %556
    %v558 = vsel %vm73, %v557, 0
    %560 = vmatpush.msra.mxu0 0.0
    %561 = vmatpush.msra.mxu0 0.0
    %562 = vmatpush.msra.mxu0 0.0
    %563 = vmatpush.msra.mxu0 0.0
    %564 = vmatpush.msra.mxu0 0.0
    %565 = vmatpush.msra.mxu0 0.0
    %566 = vmatpush.msra.mxu0 0.0
    %567 = vmatpush.msra.mxu0 0.0
    %568 = vmatpush.msra.mxu0 0.0
    %569 = vmatpush.msra.mxu0 0.0
    %570 = vmatpush.msra.mxu0 0.0
    %571 = vmatpush.msra.mxu0 0.0
    %572 = vmatpush.msra.mxu0 %v71
    %573 = vmatpush.msra.mxu0 %v70
    %574 = vmatpush.msra.mxu0 %v69
    %575 = vmatpush.msra.mxu0 %v68
    %576 = vmatmul.f32.gmra.mxu0 %v558
    %v577 = vpop.f32.mrf.mxu0
    %v578 = vadd.f32 0.0, %v577
    %579 = vdwg.mxu0
    %v581 = vrot.slane %v578, 1
    %v583 = vadd.f32 %v188, %v581
    %v584 = vtanh.pop %v583
    %v585 = vmul.f32 %v584, 0.5
    %v586 = vadd.f32 %v585, 0.5
    %v588 = vrot.slane %v547, 7
    %v590 = vmul.f32 %v586, %v588
    %592 = vrot.lane.b32.xlu0 %v584, 32
    %v593 = vpop.permute.xlu0 %592
    %v595 = vmul.f32 %v586, %v593
    %597 = vrot.lane.b32.xlu0 %v595, 32
    %v598 = vpop.permute.xlu0 %597
    %v600 = vadd.f32 %v590, %v598
    %v601 = vtanh.pop %v600
    %603 = vrot.lane.b32.xlu0 %v601, 32
    %v604 = vpop.permute.xlu0 %603
    %v606 = vmul.f32 %v586, %v604
    %vm607 = vcmask 1040384
    %v608 = vsel %vm607, %v236, %v288
    %vm609 = vcmask 1041408
    %v610 = vsel %vm609, %v608, %v341
    %vm611 = vcmask 1042432
    %v612 = vsel %vm611, %v610, %v394
    %vm613 = vcmask 1043456
    %v614 = vsel %vm613, %v612, %v447
    %vm615 = vcmask 1044480
    %v616 = vsel %vm615, %v614, %v500
    %vm617 = vcmask 1045504
    %v618 = vsel %vm617, %v616, %v553
    %vm619 = vcmask 1046528
    %v620 = vsel %vm619, %v618, %v606
    %v621 = vperm.slane %v58, 2
    %623 = vrot.lane.b32.xlu0 %v621, 64
    %v624 = vpop.permute.xlu0 %623
    %v626 = vmul.f32 %v620, %v624
    %628 = vrot.lane.b32.xlu0 %v626, 64
    %v629 = vpop.permute.xlu0 %628
    %v631 = vsel %vm73, %v629, 0.0
    %632 = vadd.xlane.f32.xlu0 %v631
    %v633 = vpop.xlane.xlu0 %632
    %v634 = vperm.slane %v58, 3
    %v635 = vadd.f32 %v633, %v634
    %vm636 = vcmask 7168
    %637 = vst.msk [vmem:[%s2] sm:$0xff] %vm636, %v635
    // Predicated region
    $region18: #{tpu_custom_call.1} parent=1 // pred_check
      _
    $region19: #{tpu_custom_call.1} parent=1 // pred_check_branch
      %639 = sbr.rel (0) target = $region21
    $region20: #{tpu_custom_call.1} parent=1 // pred_region
      _
    $region21: #{tpu_custom_call.1} parent=1 // pred_fallthru
      _
    // Predicated region
    $region22: #{tpu_custom_call.1} parent=1 // pred_check
      _
    $region23: #{tpu_custom_call.1} parent=1 // pred_check_branch
      %641 = sbr.rel (0) target = $region25
    $region24: #{tpu_custom_call.1} parent=1 // pred_region
      _
    $region25: #{tpu_custom_call.1} parent=1 // pred_fallthru
      _
    %642 = vsyncpa [#allocation3], 1
    %643 = vsyncpa [#allocation5], 1

</llo_original>
